<compile_context>
chip_gen: v5e
topology: v5e:2x2
jax: 0.10.0
libtpu: 0.0.40
codegen_flags: <defaults>
</compile_context>

<pallas_src>
import functools

import jax
import jax.numpy as jnp
from jax import lax
from jax.experimental import pallas as pl
from jax.experimental.pallas import tpu as pltpu


VOCAB_PAD = 128   # one-hot contraction dim padded to one full lane group
TN_MAX = 2048     # rows per tile (multiple of 256; amortizes ~0.35us/step).
                  # v7x note: could go to 4096, 2048 is safe on all gens.


def _round_up(x, m):
    return (x + m - 1) // m * m


def _tiling(n):
    """Return (tile_rows, padded_rows, num_tiles) for N flattened tokens."""
    n8 = _round_up(max(n, 1), 8)
    if n8 <= TN_MAX:
        return n8, n8, 1
    n_pad = _round_up(n, TN_MAX)
    return TN_MAX, n_pad, n_pad // TN_MAX


def _compiler_params():
    return pltpu.CompilerParams(
        dimension_semantics=("parallel",),       # v7x: shard tiles over 2 TCs
        vmem_limit_bytes=32 * 1024 * 1024,       # safe on v5e/v6e/v7x
    )


# ---------------------------------------------------------------------------
# Kernels
# ---------------------------------------------------------------------------
def _logits_loss_kernel(idx_ref, tgt_ref, table_ref, logits_ref, part_ref,
                        *, n_valid, tn, v):
    """One tile: embedding gather (one-hot @ table on MXU) + partial CE sum."""
    i = pl.program_id(0)
    idx = idx_ref[...]                            # (tn, 1) int32
    tgt = tgt_ref[...]                            # (tn, 1) int32
    table = table_ref[...]                        # (VOCAB_PAD, v) f32, zero-padded rows

    col_k = lax.broadcasted_iota(jnp.int32, (tn, VOCAB_PAD), 1)
    onehot = (col_k == idx).astype(jnp.float32)   # (tn, VOCAB_PAD)
    logits = jnp.dot(onehot, table, preferred_element_type=jnp.float32)  # (tn, v)
    logits_ref[...] = logits                      # un-padded (tn, v) store

    # Numerically-stable log-sum-exp over the true vocab only.
    m = jnp.max(logits, axis=-1, keepdims=True)
    lse = jnp.log(jnp.sum(jnp.exp(logits - m), axis=-1, keepdims=True)) + m
    col_v = lax.broadcasted_iota(jnp.int32, (tn, v), 1)
    picked = jnp.sum(logits * (col_v == tgt).astype(jnp.float32),
                     axis=-1, keepdims=True)

    # Mask out padded token rows of the last tile (global row >= n_valid).
    row = lax.broadcasted_iota(jnp.int32, (tn, 1), 0) + i * tn
    valid = (row < n_valid).astype(jnp.float32)
    part_ref[0, 0] = jnp.sum((lse - picked) * valid)   # SMEM scalar per tile


def _logits_kernel(idx_ref, table_ref, logits_ref, *, tn):
    """targets=None path: embedding gather only."""
    idx = idx_ref[...]                            # (tn, 1) int32
    table = table_ref[...]                        # (VOCAB_PAD, v) f32
    col_k = lax.broadcasted_iota(jnp.int32, (tn, VOCAB_PAD), 1)
    onehot = (col_k == idx).astype(jnp.float32)
    logits_ref[...] = jnp.dot(onehot, table,
                              preferred_element_type=jnp.float32)


def _loss_only_kernel(idx_ref, tgt_ref, tableT_ref, part_ref, *, n_valid, tn, v):
    """Loss-only path: lane-dense idx/targets, no logits HBM write-back.

    Token dim stays lane-major everywhere: selector matrices are
    (VOCAB_PAD, tn), logits are computed transposed as table.T @ selector,
    and softmax reductions run along the sublane (vocab) axis.
    """
    i = pl.program_id(0)
    idx = idx_ref[...]                            # (1, tn) int32, lane-dense
    tgt = tgt_ref[...]                            # (1, tn) int32
    table_t = tableT_ref[...]                     # (v, VOCAB_PAD) f32

    rows_k = lax.broadcasted_iota(jnp.int32, (VOCAB_PAD, tn), 0)
    sel = (rows_k == idx).astype(jnp.float32)     # sel[vk, n] = (idx[n] == vk)
    # logits_t[c, n] = table[idx[n], c]
    logits_t = jnp.dot(table_t, sel, preferred_element_type=jnp.float32)  # (v, tn)

    m = jnp.max(logits_t, axis=0, keepdims=True)                         # (1, tn)
    lse = jnp.log(jnp.sum(jnp.exp(logits_t - m), axis=0, keepdims=True)) + m
    rows_v = lax.broadcasted_iota(jnp.int32, (v, tn), 0)
    picked = jnp.sum(logits_t * (rows_v == tgt).astype(jnp.float32),
                     axis=0, keepdims=True)                              # (1, tn)

    pos = lax.broadcasted_iota(jnp.int32, (1, tn), 1) + i * tn
    valid = (pos < n_valid).astype(jnp.float32)
    part_ref[0, 0] = jnp.sum((lse - picked) * valid)   # SMEM scalar per tile


# ---------------------------------------------------------------------------
# Wrapper helpers
# ---------------------------------------------------------------------------
def _pad_flat(x, n_pad):
    n = x.size
    flat = x.reshape(n).astype(jnp.int32)
    if n_pad == n:
        return flat
    return jnp.pad(flat, (0, n_pad - n))


# ---------------------------------------------------------------------------
# Jitted implementations (mirror BigramLanguageModel.forward)
# ---------------------------------------------------------------------------
@jax.jit
def _forward_loss_impl(idx, table_p, targets):
    B, T = idx.shape
    V = table_p.shape[1]
    N = B * T
    tn, n_pad, num_tiles = _tiling(N)

    idx_col = _pad_flat(idx, n_pad).reshape(n_pad, 1)
    tgt_col = _pad_flat(targets, n_pad).reshape(n_pad, 1)

    kernel = functools.partial(_logits_loss_kernel, n_valid=N, tn=tn, v=V)
    logits_pad, part = pl.pallas_call(
        kernel,
        out_shape=(
            jax.ShapeDtypeStruct((n_pad, V), jnp.float32),
            jax.ShapeDtypeStruct((num_tiles, 1), jnp.float32),
        ),
        grid=(num_tiles,),
        in_specs=[
            pl.BlockSpec((tn, 1), lambda i: (i, 0)),
            pl.BlockSpec((tn, 1), lambda i: (i, 0)),
            pl.BlockSpec((VOCAB_PAD, V), lambda i: (0, 0)),   # VMEM-resident
        ],
        out_specs=(
            pl.BlockSpec((tn, V), lambda i: (i, 0)),
            pl.BlockSpec((1, 1), lambda i: (i, 0),
                         memory_space=pltpu.MemorySpace.SMEM),
        ),
        compiler_params=_compiler_params(),
        cost_estimate=pl.CostEstimate(
            flops=2 * n_pad * VOCAB_PAD * V,
            transcendentals=n_pad * V,
            bytes_accessed=(n_pad * V * 4 + 2 * n_pad * 4
                            + VOCAB_PAD * V * 4 + num_tiles * 4),
        ),
    )(idx_col, tgt_col, table_p)

    logits = logits_pad if n_pad == N else logits_pad[:N]
    loss = jnp.sum(part) / N
    return logits, loss          # logits shape (B*T, V), matching torch path


@jax.jit
def _forward_impl(idx, table_p):
    B, T = idx.shape
    V = table_p.shape[1]
    N = B * T
    tn, n_pad, num_tiles = _tiling(N)

    idx_col = _pad_flat(idx, n_pad).reshape(n_pad, 1)

    kernel = functools.partial(_logits_kernel, tn=tn)
    logits_pad = pl.pallas_call(
        kernel,
        out_shape=jax.ShapeDtypeStruct((n_pad, V), jnp.float32),
        grid=(num_tiles,),
        in_specs=[
            pl.BlockSpec((tn, 1), lambda i: (i, 0)),
            pl.BlockSpec((VOCAB_PAD, V), lambda i: (0, 0)),
        ],
        out_specs=pl.BlockSpec((tn, V), lambda i: (i, 0)),
        compiler_params=_compiler_params(),
        cost_estimate=pl.CostEstimate(
            flops=2 * n_pad * VOCAB_PAD * V,
            transcendentals=0,
            bytes_accessed=n_pad * V * 4 + n_pad * 4 + VOCAB_PAD * V * 4,
        ),
    )(idx_col, table_p)

    logits = logits_pad if n_pad == N else logits_pad[:N]
    return logits.reshape(B, T, V)


@jax.jit
def _loss_only_impl(idx, table_pt, targets):
    B, T = idx.shape
    V = table_pt.shape[0]
    N = B * T
    tn, n_pad, num_tiles = _tiling(N)

    idx_row = _pad_flat(idx, n_pad).reshape(1, n_pad)       # lane-dense
    tgt_row = _pad_flat(targets, n_pad).reshape(1, n_pad)   # lane-dense

    kernel = functools.partial(_loss_only_kernel, n_valid=N, tn=tn, v=V)
    part = pl.pallas_call(
        kernel,
        out_shape=jax.ShapeDtypeStruct((num_tiles, 1), jnp.float32),
        grid=(num_tiles,),
        in_specs=[
            pl.BlockSpec((1, tn), lambda i: (0, i)),
            pl.BlockSpec((1, tn), lambda i: (0, i)),
            pl.BlockSpec((V, VOCAB_PAD), lambda i: (0, 0)),   # VMEM-resident
        ],
        out_specs=pl.BlockSpec((1, 1), lambda i: (i, 0),
                               memory_space=pltpu.MemorySpace.SMEM),
        compiler_params=_compiler_params(),
        cost_estimate=pl.CostEstimate(
            flops=2 * n_pad * VOCAB_PAD * V,
            transcendentals=n_pad * V,
            bytes_accessed=2 * n_pad * 4 + VOCAB_PAD * V * 4 + num_tiles * 4,
        ),
    )(idx_row, tgt_row, table_pt)
    return jnp.sum(part) / N


# ---------------------------------------------------------------------------
# Public API
# ---------------------------------------------------------------------------
class BigramLanguageModel:
    """Pallas-TPU port of the PyTorch BigramLanguageModel forward pass."""

    def __init__(self, vocab_size, table=None, key=None):
        if table is None:
            key = jax.random.PRNGKey(0) if key is None else key
            # nn.Embedding default init: N(0, 1)
            table = jax.random.normal(key, (vocab_size, vocab_size),
                                      dtype=jnp.float32)
        self.vocab_size = vocab_size
        self.table = jnp.asarray(table, jnp.float32)
        # Pad the one-hot contraction (row) dim once at init (hoisted out of
        # the per-step jit per perf review); padded rows are zero (never hit).
        tp = jnp.zeros((VOCAB_PAD, vocab_size), jnp.float32)
        tp = tp.at[:vocab_size, :].set(self.table)
        self.table_p = tp                 # (128, V)  : one-hot @ table
        self.table_pt = jnp.asarray(tp.T)  # (V, 128)  : loss-only fast path

    def forward(self, idx, targets=None):
        """Matches torch: returns ((B,T,V), None) or ((B*T,V), scalar loss)."""
        if targets is None:
            return _forward_impl(idx, self.table_p), None
        return _forward_loss_impl(idx, self.table_p, targets)

    __call__ = forward

    def loss(self, idx, targets):
        """Loss-only fast path: skips the (N, V) logits HBM write-back."""
        return _loss_only_impl(idx, self.table_pt, targets)


# ---------------------------------------------------------------------------
# Reference (pure JAX) for sanity checking
# ---------------------------------------------------------------------------
def _reference_forward(idx, table, targets=None):
    logits = table[idx]                           # (B, T, V)
    if targets is None:
        return logits, None
    B, T, V = logits.shape
    lf = logits.reshape(B * T, V)
    tf = targets.reshape(B * T)
    lse = jax.scipy.special.logsumexp(lf, axis=-1)
    picked = jnp.take_along_axis(lf, tf[:, None], axis=-1)[:, 0]
    return lf, jnp.mean(lse - picked)


if __name__ == "__main__":
    vocab_size = 65   # e.g. tiny-shakespeare char vocab
    B, T = 2, 8

    key = jax.random.PRNGKey(0)
    k_tab, k_idx, k_tgt = jax.random.split(key, 3)

    table = jax.random.normal(k_tab, (vocab_size, vocab_size), dtype=jnp.float32)
    idx = jax.random.randint(k_idx, (B, T), 0, vocab_size, dtype=jnp.int32)
    targets = jax.random.randint(k_tgt, (B, T), 0, vocab_size, dtype=jnp.int32)

    model = BigramLanguageModel(vocab_size, table=table)

    # Path with targets (logits reshaped to (B*T, V) + scalar loss)
    logits, loss = model(idx, targets)
    jax.block_until_ready((logits, loss))

    # Path without targets (loss is None), mirrors func_test()
    logits_nt, loss_nt = model(idx)
    jax.block_until_ready(logits_nt)
    assert loss_nt is None

    # Loss-only fast path (no logits write-back)
    loss_only = model.loss(idx, targets)
    jax.block_until_ready(loss_only)

    # Sanity check against pure-JAX reference
    ref_logits_flat, ref_loss = _reference_forward(idx, table, targets)
    ref_logits_3d, _ = _reference_forward(idx, table, None)
    assert logits.shape == (B * T, vocab_size)
    assert logits_nt.shape == (B, T, vocab_size)
    assert jnp.allclose(logits, ref_logits_flat, atol=1e-5)
    assert jnp.allclose(logits_nt, ref_logits_3d, atol=1e-5)
    assert jnp.allclose(loss, ref_loss, atol=1e-5)
    assert jnp.allclose(loss_only, ref_loss, atol=1e-5)

    print("KERNEL_OK")
</pallas_src>

<mosaic_0001>
module attributes {stable_mosaic.version = 11 : i64} {
  func.func @_logits_loss_kernel(%arg0: i32, %arg1: memref<16x1xi32, #tpu.memory_space<vmem>>, %arg2: memref<16x1xi32, #tpu.memory_space<vmem>>, %arg3: memref<128x65xf32, #tpu.memory_space<vmem>>, %arg4: memref<16x65xf32, #tpu.memory_space<vmem>>, %arg5: memref<1x1xf32, #tpu.memory_space<smem>>) attributes {dimension_semantics = [#tpu.dimension_semantics<parallel>], iteration_bounds = array<i64: 1>, scalar_prefetch = 0 : i64, scratch_operands = 0 : i64, tpu.core_type = #tpu.core_type<tc>, window_params = [{transform_indices = @transform_0, window_bounds = array<i64: 16, 1>}, {transform_indices = @transform_1, window_bounds = array<i64: 16, 1>}, {pipeline_mode = #tpu.pipeline_mode<synchronous>, transform_indices = @transform_2, window_bounds = array<i64: 128, 65>}, {transform_indices = @transform_3, window_bounds = array<i64: 16, 65>}, {transform_indices = @transform_4, window_bounds = array<i64: 1, 1>}]} {
    %c0 = arith.constant 0 : index
    %c0_0 = arith.constant 0 : index
    %0 = vector.load %arg1[%c0, %c0_0] : memref<16x1xi32, #tpu.memory_space<vmem>>, vector<16x1xi32>
    %c0_1 = arith.constant 0 : index
    %c0_2 = arith.constant 0 : index
    %1 = vector.load %arg2[%c0_1, %c0_2] : memref<16x1xi32, #tpu.memory_space<vmem>>, vector<16x1xi32>
    %c0_3 = arith.constant 0 : index
    %c0_4 = arith.constant 0 : index
    %2 = vector.load %arg3[%c0_3, %c0_4] : memref<128x65xf32, #tpu.memory_space<vmem>>, vector<128x65xf32>
    %3 = tpu.iota {dimensions = array<i32: 1>} : vector<16x128xi32>
    %4 = vector.broadcast %0 : vector<16x1xi32> to vector<16x128xi32>
    %5 = arith.cmpi eq, %3, %4 : vector<16x128xi32>
    %6 = arith.extui %5 : vector<16x128xi1> to vector<16x128xi32>
    %7 = arith.sitofp %6 : vector<16x128xi32> to vector<16x128xf32>
    %cst = arith.constant dense<0.000000e+00> : vector<16x65xf32>
    %8 = tpu.matmul %7, %2, %cst {dimension_numbers = #tpu.dot_dimension_numbers<[1], [0], [0], [1], [0, 0, 1, 1], [], []>} : vector<16x128xf32>, vector<128x65xf32>, vector<16x65xf32> -> vector<16x65xf32>
    %c0_5 = arith.constant 0 : index
    %c0_6 = arith.constant 0 : index
    %9 = vector.load %arg4[%c0_5, %c0_6] : memref<16x65xf32, #tpu.memory_space<vmem>>, vector<16x65xf32>
    tpu.vector_store %arg4[%c0_5, %c0_6], %8 {strides = array<i32>} : memref<16x65xf32, #tpu.memory_space<vmem>>, vector<16x65xf32>,
    %cst_7 = arith.constant dense<0xFF800000> : vector<16xf32>
    %10 = vector.multi_reduction <maximumf>, %8, %cst_7 [1] : vector<16x65xf32> to vector<16xf32>
    %11 = vector.shape_cast %10 : vector<16xf32> to vector<16x1xf32>
    %12 = vector.broadcast %11 : vector<16x1xf32> to vector<16x65xf32>
    %13 = arith.subf %8, %12 : vector<16x65xf32>
    %14 = math.exp %13 : vector<16x65xf32>
    %cst_8 = arith.constant dense<0.000000e+00> : vector<16xf32>
    %15 = vector.multi_reduction <add>, %14, %cst_8 [1] : vector<16x65xf32> to vector<16xf32>
    %16 = vector.shape_cast %15 : vector<16xf32> to vector<16x1xf32>
    %17 = math.log %16 : vector<16x1xf32>
    %18 = arith.addf %17, %11 : vector<16x1xf32>
    %19 = tpu.iota {dimensions = array<i32: 1>} : vector<16x65xi32>
    %20 = vector.broadcast %1 : vector<16x1xi32> to vector<16x65xi32>
    %21 = arith.cmpi eq, %19, %20 : vector<16x65xi32>
    %22 = arith.extui %21 : vector<16x65xi1> to vector<16x65xi32>
    %23 = arith.sitofp %22 : vector<16x65xi32> to vector<16x65xf32>
    %24 = arith.mulf %8, %23 : vector<16x65xf32>
    %cst_9 = arith.constant dense<0.000000e+00> : vector<16xf32>
    %25 = vector.multi_reduction <add>, %24, %cst_9 [1] : vector<16x65xf32> to vector<16xf32>
    %26 = vector.shape_cast %25 : vector<16xf32> to vector<16x1xf32>
    %27 = tpu.iota {dimensions = array<i32: 0>} : vector<16x1xi32>
    %c16_i32 = arith.constant 16 : i32
    %28 = arith.muli %arg0, %c16_i32 : i32
    %29 = vector.broadcast %28 : i32 to vector<16x1xi32>
    %30 = arith.addi %27, %29 : vector<16x1xi32>
    %c16_i32_10 = arith.constant 16 : i32
    %31 = vector.broadcast %c16_i32_10 : i32 to vector<16x1xi32>
    %32 = arith.cmpi slt, %30, %31 : vector<16x1xi32>
    %33 = arith.extui %32 : vector<16x1xi1> to vector<16x1xi32>
    %34 = arith.sitofp %33 : vector<16x1xi32> to vector<16x1xf32>
    %35 = arith.subf %18, %26 : vector<16x1xf32>
    %36 = arith.mulf %35, %34 : vector<16x1xf32>
    %37 = vector.shape_cast %36 : vector<16x1xf32> to vector<1x16x1xf32>
    %cst_11 = arith.constant dense<0.000000e+00> : vector<1xf32>
    %38 = vector.multi_reduction <add>, %37, %cst_11 [1, 2] : vector<1x16x1xf32> to vector<1xf32>
    %39 = vector.shape_cast %38 : vector<1xf32> to vector<1x1x1xf32>
    %40 = vector.extract %39[0, 0, 0] : f32 from vector<1x1x1xf32>
    %c0_12 = arith.constant 0 : index
    %c0_13 = arith.constant 0 : index
    %41 = memref.load %arg5[%c0_12, %c0_13] : memref<1x1xf32, #tpu.memory_space<smem>>
    memref.store %40, %arg5[%c0_12, %c0_13] : memref<1x1xf32, #tpu.memory_space<smem>>
    return
  }
  func.func @transform_0(%arg0: i32) -> (i32, i32) {
    %c0_i32 = arith.constant 0 : i32
    %c0_i32_0 = arith.constant 0 : i32
    return %arg0, %c0_i32 : i32, i32
  }
  func.func @transform_1(%arg0: i32) -> (i32, i32) {
    %c0_i32 = arith.constant 0 : i32
    %c0_i32_0 = arith.constant 0 : i32
    return %arg0, %c0_i32 : i32, i32
  }
  func.func @transform_2(%arg0: i32) -> (i32, i32) {
    %c0_i32 = arith.constant 0 : i32
    %c0_i32_0 = arith.constant 0 : i32
    %c0_i32_1 = arith.constant 0 : i32
    return %c0_i32, %c0_i32_0 : i32, i32
  }
  func.func @transform_3(%arg0: i32) -> (i32, i32) {
    %c0_i32 = arith.constant 0 : i32
    %c0_i32_0 = arith.constant 0 : i32
    return %arg0, %c0_i32 : i32, i32
  }
  func.func @transform_4(%arg0: i32) -> (i32, i32) {
    %c0_i32 = arith.constant 0 : i32
    %c0_i32_0 = arith.constant 0 : i32
    return %arg0, %c0_i32 : i32, i32
  }
}

</mosaic_0001>

<llo_original>
// kernel: _forward_loss_impl.1
$region0: #{_forward_loss_impl.1}
  #allocation0 [shape = 'u32[]', space=smem, size = 0x4, offset = 0x4, fixed_abs, tag = 'smem constant byte address 0x4 - core index']
  #allocation1 [shape = 'u32[72,128]{1,0:T(1,128)}', space=vmem, size = 0x9000, scoped, tag = 'internal scratch']
  %s0 = inlined_call_operand.vmem [shape: s32[16,1], index: 0, kind: input, shape index: {}]
  %s1 = inlined_call_operand.vmem [shape: s32[16,1], index: 1, kind: input, shape index: {}]
  %s2 = inlined_call_operand.vmem [shape: f32[128,65], index: 2, kind: input, shape index: {}]
  %s3 = inlined_call_operand.hbm [shape: f32[16,65], index: 3, kind: output, shape index: {0}]
  %s4 = inlined_call_operand.hbm [shape: f32[1,1], index: 4, kind: output, shape index: {1}]
  %5 = xla_tuple %s3, %s4
  %s6 = sld [smem:[#allocation0]]
  $region30: #{_forward_loss_impl.1} parent=0
    _
  %s8 = ssub.s32 1, %s6
  %s9 = scalar_select 0, %s8, %s6
  $region1: #{_forward_loss_impl.1} parent=0
    #allocation2 [shape = 'u8[8192]{0}', space=vmem, size = 0x2000, scoped, tag = 'output window, operand 0, single buffered']
    #allocation3 [shape = 's32[1]{0}', space=sflag, size = 0x4, scoped, tag = 'scoped memory for _forward_loss_impl.1']
    #allocation4 [shape = 's32[1]{0}', space=sflag, size = 0x4, scoped, tag = 'scoped memory for _forward_loss_impl.1']
    #allocation5 [shape = 'u8[512]{0}', space=smem, size = 0x200, scoped, tag = 'output window, operand 1, single buffered']
    %10 = vsyncpa [#allocation3], 0
    %11 = vsyncpa [#allocation4], 0
    // Predicated region
    $region2: #{_forward_loss_impl.1} parent=1 // pred_check
      _
    $region3: #{_forward_loss_impl.1} parent=1 // pred_check_branch
      %13 = sbr.rel (0) target = $region5
    $region4: #{_forward_loss_impl.1} parent=1 // pred_region
      _
    $region5: #{_forward_loss_impl.1} parent=1 // pred_fallthru
      _
    // Predicated region
    $region6: #{_forward_loss_impl.1} parent=1 // pred_check
      _
    $region7: #{_forward_loss_impl.1} parent=1 // pred_check_branch
      %15 = sbr.rel (0) target = $region9
    $region8: #{_forward_loss_impl.1} parent=1 // pred_region
      _
    $region9: #{_forward_loss_impl.1} parent=1 // pred_fallthru
      _
    // Predicated region
    $region10: #{_forward_loss_impl.1} parent=1 // pred_check
      _
    $region11: #{_forward_loss_impl.1} parent=1 // pred_check_branch
      %17 = sbr.rel (0) target = $region13
    $region12: #{_forward_loss_impl.1} parent=1 // pred_region
      _
    $region13: #{_forward_loss_impl.1} parent=1 // pred_fallthru
      _
    %v18 = vld [vmem:[%s0] sm:$0xff]
    %v19 = vld [vmem:[%s0 + $0x8] sm:$0xff]
    %v20 = vld [vmem:[%s1] sm:$0xff]
    %v21 = vld [vmem:[%s1 + $0x8] sm:$0xff]
    %v22 = vld [vmem:[%s2] sm:$0xff]
    %v23 = vld [vmem:[%s2 + $0x8] sm:$0xff]
    %v24 = vld [vmem:[%s2 + $0x10] sm:$0xff]
    %v25 = vld [vmem:[%s2 + $0x18] sm:$0xff]
    %v26 = vld [vmem:[%s2 + $0x20] sm:$0xff]
    %v27 = vld [vmem:[%s2 + $0x28] sm:$0xff]
    %v28 = vld [vmem:[%s2 + $0x30] sm:$0xff]
    %v29 = vld [vmem:[%s2 + $0x38] sm:$0xff]
    %v30 = vld [vmem:[%s2 + $0x40] sm:$0xff]
    %v31 = vld [vmem:[%s2 + $0x48] sm:$0xff]
    %v32 = vld [vmem:[%s2 + $0x50] sm:$0xff]
    %v33 = vld [vmem:[%s2 + $0x58] sm:$0xff]
    %v34 = vld [vmem:[%s2 + $0x60] sm:$0xff]
    %v35 = vld [vmem:[%s2 + $0x68] sm:$0xff]
    %v36 = vld [vmem:[%s2 + $0x70] sm:$0xff]
    %v37 = vld [vmem:[%s2 + $0x78] sm:$0xff]
    %v38 = vlaneseq
    %v39 = vand.u32 %v38, 127
    %40 = vset.pattern.permute.xlu0 0
    %41 = vperm.xlu0 %40, %v18
    %v42 = vpop.permute.xlu0 %41
    %43 = vset.pattern.permute.xlu0 0
    %44 = vperm.xlu0 %43, %v19
    %v45 = vpop.permute.xlu0 %44
    %vm46 = vcmp.eq.s32.totalorder %v39, %v42
    %vm47 = vcmp.eq.s32.totalorder %v39, %v45
    %v48 = vsel %vm46, 1, 0
    %v49 = vsel %vm47, 1, 0
    %v50 = vcvt.s32.f32 %v48
    %v51 = vcvt.s32.f32 %v49
    %52 = vmatpush.msra.mxu0 %v37
    %53 = vmatpush.msra.mxu0 %v36
    %54 = vmatpush.msra.mxu0 %v35
    %55 = vmatpush.msra.mxu0 %v34
    %56 = vmatpush.msra.mxu0 %v33
    %57 = vmatpush.msra.mxu0 %v32
    %58 = vmatpush.msra.mxu0 %v31
    %59 = vmatpush.msra.mxu0 %v30
    %60 = vmatpush.msra.mxu0 %v29
    %61 = vmatpush.msra.mxu0 %v28
    %62 = vmatpush.msra.mxu0 %v27
    %63 = vmatpush.msra.mxu0 %v26
    %64 = vmatpush.msra.mxu0 %v25
    %65 = vmatpush.msra.mxu0 %v24
    %66 = vmatpush.msra.mxu0 %v23
    %67 = vmatpush.msra.mxu0 %v22
    %68 = vmatmul.f32.gmra.mxu0 %v50
    %v69 = vpop.f32.mrf.mxu0
    %v70 = vadd.f32 0.0, %v69
    %71 = vmatmul.f32.gmra.mxu0 %v51
    %v72 = vpop.f32.mrf.mxu0
    %v73 = vadd.f32 0.0, %v72
    %74 = vdwg.mxu0
    %vm75 = vcmask 531456
    %76 = vst.msk [vmem:[#allocation2] sm:$0xff] %vm75, %v70
    %77 = vst.msk [vmem:[#allocation2 + $0x8] sm:$0xff] %vm75, %v73
    %v78 = vsel %vm75, %v70, -inf
    %79 = vmax.xlane.f32.xlu0 %v78
    %v80 = vpop.xlane.xlu0 %79
    %v81 = vsel %vm75, %v73, -inf
    %82 = vmax.xlane.f32.xlu0 %v81
    %v83 = vpop.xlane.xlu0 %82
    %v84 = vsub.f32 %v70, %v80
    %v85 = vsub.f32 %v73, %v83
    %v86 = vmul.f32 %v84, 1.442695
    %v87 = vpow.pop %v86
    %v88 = vmul.f32 %v85, 1.442695
    %v89 = vpow.pop %v88
    %v90 = vsel %vm75, %v87, 0.0
    %91 = vadd.xlane.f32.xlu0 %v90
    %v92 = vpop.xlane.xlu0 %91
    %v93 = vsel %vm75, %v89, 0.0
    %94 = vadd.xlane.f32.xlu0 %v93
    %v95 = vpop.xlane.xlu0 %94
    %v96 = vlog2.pop %v92
    %v97 = vmul.f32 %v96, 0.6931472
    %v98 = vlog2.pop %v95
    %v99 = vmul.f32 %v98, 0.6931472
    %v100 = vadd.f32 %v97, %v80
    %v101 = vadd.f32 %v99, %v83
    %102 = vset.pattern.permute.xlu0 0
    %103 = vperm.xlu0 %102, %v20
    %v104 = vpop.permute.xlu0 %103
    %105 = vset.pattern.permute.xlu0 0
    %106 = vperm.xlu0 %105, %v21
    %v107 = vpop.permute.xlu0 %106
    %vm108 = vcmp.eq.s32.totalorder %v39, %v104
    %vm109 = vcmp.eq.s32.totalorder %v39, %v107
    %v110 = vsel %vm108, 1, 0
    %v111 = vsel %vm109, 1, 0
    %v112 = vcvt.s32.f32 %v110
    %v113 = vcvt.s32.f32 %v111
    %v114 = vmul.f32 %v70, %v112
    %v115 = vmul.f32 %v73, %v113
    %v116 = vsel %vm75, %v114, 0.0
    %117 = vadd.xlane.f32.xlu0 %v116
    %v118 = vpop.xlane.xlu0 %117
    %v119 = vsel %vm75, %v115, 0.0
    %120 = vadd.xlane.f32.xlu0 %v119
    %v121 = vpop.xlane.xlu0 %120
    %v122 = vlaneseq
    %v123 = vshrl.u32 %v122, 7
    %v124 = vadd.s32 %v123, 8
    %s125 = smul.u32 0, 16
    %v126 = vstv %s125
    %v127 = vadd.s32 %v123, %v126
    %v128 = vadd.s32 %v124, %v126
    %vm129 = vcmp.lt.s32.totalorder %v127, 16
    %vm130 = vcmp.lt.s32.totalorder %v128, 16
    %v131 = vsel %vm129, 1, 0
    %v132 = vsel %vm130, 1, 0
    %v133 = vcvt.s32.f32 %v131
    %v134 = vcvt.s32.f32 %v132
    %v135 = vsub.f32 %v100, %v118
    %v136 = vsub.f32 %v101, %v121
    %v137 = vmul.f32 %v135, %v133
    %v138 = vmul.f32 %v136, %v134
    %vm139 = vcmask 7168
    %v140 = vsel %vm139, %v137, 0.0
    %v141 = vsel %vm139, %v138, 0.0
    %v142 = vadd.f32 %v140, %v141
    %143 = vadd.xlane.f32.xlu0 %v142
    %v144 = vpop.xlane.xlu0 %143
    %v145 = vrot.slane %v144, 4
    %v146 = vadd.f32 %v144, %v145
    %v147 = vrot.slane %v146, 2
    %v148 = vadd.f32 %v146, %v147
    %v149 = vrot.slane %v148, 1
    %v150 = vadd.f32 %v148, %v149
    %s151 = vtos %v150
    %s152 = scalar_lea.smem [#allocation5], 0
    %153 = sst [smem:[%s152]] %s151
    // Predicated region
    $region14: #{_forward_loss_impl.1} parent=1 // pred_check
      _
    $region15: #{_forward_loss_impl.1} parent=1 // pred_check_branch
      %155 = sbr.rel (0) target = $region17
    $region16: #{_forward_loss_impl.1} parent=1 // pred_region
      %157 = vsyncadd [#allocation3], 0
      %s158 = sshll.u32 [#allocation2], 4
      %s159 = int_to_ptr.vmem [resolvable:$true] %s158
      %s160 = sshll.u32 %s3, 4
      %s161 = int_to_ptr.hbm [resolvable:$true] %s160
      %166 = dma.vmem_to_hbm [thread:$0]  %s159, 256, %s161, [#allocation3], 128, 128, 8
    $region17: #{_forward_loss_impl.1} parent=1 // pred_fallthru
      _
    // Predicated region
    $region18: #{_forward_loss_impl.1} parent=1 // pred_check
      _
    $region19: #{_forward_loss_impl.1} parent=1 // pred_check_branch
      %168 = sbr.rel (0) target = $region21
    $region20: #{_forward_loss_impl.1} parent=1 // pred_region
      %170 = vsyncadd [#allocation4], 0
      %s172 = sshll.u32 %s4, 4
      %s173 = int_to_ptr.hbm [resolvable:$true] %s172
      %175 = dma.smem_to_hbm [#allocation5], 16, %s173, [#allocation4]
    $region21: #{_forward_loss_impl.1} parent=1 // pred_fallthru
      _
    // Predicated region
    $region22: #{_forward_loss_impl.1} parent=1 // pred_check
      _
    $region23: #{_forward_loss_impl.1} parent=1 // pred_check_branch
      %177 = sbr.rel (0) target = $region25
    $region24: #{_forward_loss_impl.1} parent=1 // pred_region
      %179 = dma.done [#allocation3], 256
    $region25: #{_forward_loss_impl.1} parent=1 // pred_fallthru
      _
    // Predicated region
    $region26: #{_forward_loss_impl.1} parent=1 // pred_check
      _
    $region27: #{_forward_loss_impl.1} parent=1 // pred_check_branch
      %181 = sbr.rel (0) target = $region29
    $region28: #{_forward_loss_impl.1} parent=1 // pred_region
      %183 = dma.done [#allocation4], 16
    $region29: #{_forward_loss_impl.1} parent=1 // pred_fallthru
      _
    %184 = sfence
    %185 = vsyncpa [#allocation3], 1
    %186 = vsyncpa [#allocation4], 1

</llo_original>
